<compile_context>
chip_gen: v6e
topology: v6e:2x2x1
jax: 0.10.0
libtpu: 0.0.40
codegen_flags: <defaults>
</compile_context>

<pallas_src>
import jax
import jax.numpy as jnp
from jax.experimental import pallas as pl
from jax.experimental.pallas import tpu as pltpu


def _attn_classify_kernel(sim_ref, y_ref, out_ref):
    # sim_ref: [TS, B], y_ref: [TS, B, C], out_ref: [TS, C]
    sim = sim_ref[...].astype(jnp.float32)               # [TS, B]

    # Numerically stable softmax over axis=1 (the batch axis), matching nn.Softmax()'s
    # implicit dim=1 for 2-D inputs in the original PyTorch module.
    m = jnp.max(sim, axis=1, keepdims=True)              # [TS, 1]
    e = jnp.exp(sim - m)                                  # [TS, B]
    denom = jnp.sum(e, axis=1, keepdims=True)             # [TS, 1]

    ts, b_dim = sim.shape
    c_dim = out_ref.shape[-1]

    # Contract with the UN-normalized weights first, accumulating over the small static
    # batch axis instead of materializing a [TS, B, C] broadcasted temporary:
    #   un[s, c] = sum_b e[s, b] * y[s, b, c]
    un = jnp.zeros((ts, c_dim), jnp.float32)
    for b in range(b_dim):                                # B is small & static -> unrolled
        un = un + e[:, b:b + 1] * y_ref[:, b, :].astype(jnp.float32)

    # Apply the exact reciprocal once to the small [TS, C] result (keeps 1e-5 tolerance).
    out_ref[...] = (un * pl.reciprocal(denom, approx=False)).astype(out_ref.dtype)


def _cost_estimate(s, b, c, itemsize):
    return pl.CostEstimate(
        flops=2 * s * b * c + 4 * s * b,          # contraction + softmax elementwise
        transcendentals=s * b,                    # exp
        bytes_accessed=itemsize * (s * b + s * b * c + s * c),
    )


def _gridless_call(similarities, support_set_y):
    # Whole problem is a few KiB: map operands whole-array into VMEM, run the body once.
    # No grid -> no software-pipeline prologue/epilogue or double buffers.
    S, B = similarities.shape
    C = support_set_y.shape[-1]
    return pl.pallas_call(
        _attn_classify_kernel,
        out_shape=jax.ShapeDtypeStruct((S, C), similarities.dtype),
        in_specs=[
            pl.BlockSpec(memory_space=pltpu.MemorySpace.VMEM),
            pl.BlockSpec(memory_space=pltpu.MemorySpace.VMEM),
        ],
        out_specs=pl.BlockSpec(memory_space=pltpu.MemorySpace.VMEM),
        cost_estimate=_cost_estimate(S, B, C, similarities.dtype.itemsize),
    )(similarities, support_set_y)


def _gridded_call(similarities, support_set_y, block_s):
    # Batched-episode path: tile the (possibly folded) sequence axis.  TS=512 keeps
    # double-buffered f32 tiles at ~0.6 MiB total -> fine under the 16 MiB v5e scoped
    # default and far under the v6e/v7x limits.
    S, B = similarities.shape
    C = support_set_y.shape[-1]
    S_pad = -(-S // block_s) * block_s
    if S_pad != S:
        # Zero-padded rows produce a finite uniform softmax and zero outputs; sliced away.
        similarities = jnp.pad(similarities, ((0, S_pad - S), (0, 0)))
        support_set_y = jnp.pad(support_set_y, ((0, S_pad - S), (0, 0), (0, 0)))

    out = pl.pallas_call(
        _attn_classify_kernel,
        out_shape=jax.ShapeDtypeStruct((S_pad, C), similarities.dtype),
        grid_spec=pltpu.PrefetchScalarGridSpec(
            num_scalar_prefetch=0,
            grid=(S_pad // block_s,),
            in_specs=[
                pl.BlockSpec((block_s, B), lambda i: (i, 0)),
                pl.BlockSpec((block_s, B, C), lambda i: (i, 0, 0)),
            ],
            out_specs=pl.BlockSpec((block_s, C), lambda i: (i, 0)),
        ),
        compiler_params=pltpu.CompilerParams(
            # Shards the S grid across v7x's 2 TensorCores; no-op on v5e/v6e (1 TC).
            dimension_semantics=("parallel",),
        ),
        cost_estimate=_cost_estimate(S_pad, B, C, similarities.dtype.itemsize),
    )(similarities, support_set_y)
    return out[:S] if S_pad != S else out


def attentional_classify(similarities, support_set_y, *, block_s=512):
    """preds[s, c] = sum_b softmax(similarities, axis=1)[s, b] * support_set_y[s, b, c]

    For meta-learning loops, fold the episode axis into S before calling so the launch
    cost amortizes; the gridded path then tiles S and parallelizes across TensorCores.
    """
    S, B = similarities.shape
    S2, B2, C = support_set_y.shape
    assert S == S2 and B == B2

    if S <= block_s:
        return _gridless_call(similarities, support_set_y)
    return _gridded_call(similarities, support_set_y, block_s)


def _reference(similarities, support_set_y):
    p = jax.nn.softmax(similarities, axis=1)                       # [S, B]
    return jnp.einsum("sb,sbc->sc", p, support_set_y)              # [S, C]


if __name__ == "__main__":
    key = jax.random.PRNGKey(0)
    k_sim, k_cls, k_sim2, k_cls2 = jax.random.split(key, 4)

    # --- Small case matching the module's typical episode shapes ------------------
    S, B, C = 8, 16, 8  # sequence_length, batch_size, num_classes
    similarities = jax.random.normal(k_sim, (S, B), dtype=jnp.float32)
    labels = jax.random.randint(k_cls, (S, B), 0, C)
    support_set_y = jax.nn.one_hot(labels, C, dtype=jnp.float32)   # [S, B, C]

    preds = jax.block_until_ready(attentional_classify(similarities, support_set_y))
    ref = _reference(similarities, support_set_y)
    assert preds.shape == (S, C)
    assert jnp.allclose(preds, ref, atol=1e-5, rtol=1e-5), "mismatch vs reference (small)"

    # --- Batched-episode case exercising the gridded / parallel path --------------
    S_big = 1024  # e.g. 128 episodes of length 8 folded into one leading axis
    sim_big = jax.random.normal(k_sim2, (S_big, B), dtype=jnp.float32)
    labels_big = jax.random.randint(k_cls2, (S_big, B), 0, C)
    y_big = jax.nn.one_hot(labels_big, C, dtype=jnp.float32)

    preds_big = jax.block_until_ready(attentional_classify(sim_big, y_big))
    ref_big = _reference(sim_big, y_big)
    assert preds_big.shape == (S_big, C)
    assert jnp.allclose(preds_big, ref_big, atol=1e-5, rtol=1e-5), "mismatch vs reference (batched)"

    # TODO(synk): PyTorch's .squeeze() returns shape [C] when S == 1; this wrapper always
    # returns (S, C).
    print("KERNEL_OK")
</pallas_src>

<mosaic_0001>
module attributes {stable_mosaic.version = 11 : i64} {
  func.func @_attn_classify_kernel(%arg0: memref<8x16xf32, #tpu.memory_space<vmem>>, %arg1: memref<8x16x8xf32, #tpu.memory_space<vmem>>, %arg2: memref<8x8xf32, #tpu.memory_space<vmem>>) attributes {dimension_semantics = [], scalar_prefetch = 0 : i64, scratch_operands = 0 : i64, tpu.core_type = #tpu.core_type<tc>} {
    %c0 = arith.constant 0 : index
    %c0_0 = arith.constant 0 : index
    %0 = vector.load %arg0[%c0, %c0_0] : memref<8x16xf32, #tpu.memory_space<vmem>>, vector<8x16xf32>
    %cst = arith.constant dense<0xFF800000> : vector<8xf32>
    %1 = vector.multi_reduction <maximumf>, %0, %cst [1] : vector<8x16xf32> to vector<8xf32>
    %2 = vector.shape_cast %1 : vector<8xf32> to vector<8x1xf32>
    %3 = vector.broadcast %2 : vector<8x1xf32> to vector<8x16xf32>
    %4 = arith.subf %0, %3 : vector<8x16xf32>
    %5 = math.exp %4 : vector<8x16xf32>
    %cst_1 = arith.constant dense<0.000000e+00> : vector<8xf32>
    %6 = vector.multi_reduction <add>, %5, %cst_1 [1] : vector<8x16xf32> to vector<8xf32>
    %7 = vector.shape_cast %6 : vector<8xf32> to vector<8x1xf32>
    %cst_2 = arith.constant 0.000000e+00 : f32
    %8 = vector.broadcast %cst_2 : f32 to vector<8x8xf32>
    %9 = vector.extract_strided_slice %5 {offsets = [0, 0], sizes = [8, 1], strides = [1, 1]} : vector<8x16xf32> to vector<8x1xf32>
    %c0_3 = arith.constant 0 : index
    %c0_4 = arith.constant 0 : index
    %c0_5 = arith.constant 0 : index
    %10 = vector.load %arg1[%c0_3, %c0_4, %c0_5] : memref<8x16x8xf32, #tpu.memory_space<vmem>>, vector<8x1x8xf32>
    %11 = vector.shape_cast %10 : vector<8x1x8xf32> to vector<8x8xf32>
    %12 = vector.broadcast %9 : vector<8x1xf32> to vector<8x8xf32>
    %13 = arith.mulf %12, %11 : vector<8x8xf32>
    %14 = arith.addf %8, %13 : vector<8x8xf32>
    %15 = vector.extract_strided_slice %5 {offsets = [0, 1], sizes = [8, 1], strides = [1, 1]} : vector<8x16xf32> to vector<8x1xf32>
    %c0_6 = arith.constant 0 : index
    %c1 = arith.constant 1 : index
    %c0_7 = arith.constant 0 : index
    %16 = vector.load %arg1[%c0_6, %c1, %c0_7] : memref<8x16x8xf32, #tpu.memory_space<vmem>>, vector<8x1x8xf32>
    %17 = vector.shape_cast %16 : vector<8x1x8xf32> to vector<8x8xf32>
    %18 = vector.broadcast %15 : vector<8x1xf32> to vector<8x8xf32>
    %19 = arith.mulf %18, %17 : vector<8x8xf32>
    %20 = arith.addf %14, %19 : vector<8x8xf32>
    %21 = vector.extract_strided_slice %5 {offsets = [0, 2], sizes = [8, 1], strides = [1, 1]} : vector<8x16xf32> to vector<8x1xf32>
    %c0_8 = arith.constant 0 : index
    %c2 = arith.constant 2 : index
    %c0_9 = arith.constant 0 : index
    %22 = vector.load %arg1[%c0_8, %c2, %c0_9] : memref<8x16x8xf32, #tpu.memory_space<vmem>>, vector<8x1x8xf32>
    %23 = vector.shape_cast %22 : vector<8x1x8xf32> to vector<8x8xf32>
    %24 = vector.broadcast %21 : vector<8x1xf32> to vector<8x8xf32>
    %25 = arith.mulf %24, %23 : vector<8x8xf32>
    %26 = arith.addf %20, %25 : vector<8x8xf32>
    %27 = vector.extract_strided_slice %5 {offsets = [0, 3], sizes = [8, 1], strides = [1, 1]} : vector<8x16xf32> to vector<8x1xf32>
    %c0_10 = arith.constant 0 : index
    %c3 = arith.constant 3 : index
    %c0_11 = arith.constant 0 : index
    %28 = vector.load %arg1[%c0_10, %c3, %c0_11] : memref<8x16x8xf32, #tpu.memory_space<vmem>>, vector<8x1x8xf32>
    %29 = vector.shape_cast %28 : vector<8x1x8xf32> to vector<8x8xf32>
    %30 = vector.broadcast %27 : vector<8x1xf32> to vector<8x8xf32>
    %31 = arith.mulf %30, %29 : vector<8x8xf32>
    %32 = arith.addf %26, %31 : vector<8x8xf32>
    %33 = vector.extract_strided_slice %5 {offsets = [0, 4], sizes = [8, 1], strides = [1, 1]} : vector<8x16xf32> to vector<8x1xf32>
    %c0_12 = arith.constant 0 : index
    %c4 = arith.constant 4 : index
    %c0_13 = arith.constant 0 : index
    %34 = vector.load %arg1[%c0_12, %c4, %c0_13] : memref<8x16x8xf32, #tpu.memory_space<vmem>>, vector<8x1x8xf32>
    %35 = vector.shape_cast %34 : vector<8x1x8xf32> to vector<8x8xf32>
    %36 = vector.broadcast %33 : vector<8x1xf32> to vector<8x8xf32>
    %37 = arith.mulf %36, %35 : vector<8x8xf32>
    %38 = arith.addf %32, %37 : vector<8x8xf32>
    %39 = vector.extract_strided_slice %5 {offsets = [0, 5], sizes = [8, 1], strides = [1, 1]} : vector<8x16xf32> to vector<8x1xf32>
    %c0_14 = arith.constant 0 : index
    %c5 = arith.constant 5 : index
    %c0_15 = arith.constant 0 : index
    %40 = vector.load %arg1[%c0_14, %c5, %c0_15] : memref<8x16x8xf32, #tpu.memory_space<vmem>>, vector<8x1x8xf32>
    %41 = vector.shape_cast %40 : vector<8x1x8xf32> to vector<8x8xf32>
    %42 = vector.broadcast %39 : vector<8x1xf32> to vector<8x8xf32>
    %43 = arith.mulf %42, %41 : vector<8x8xf32>
    %44 = arith.addf %38, %43 : vector<8x8xf32>
    %45 = vector.extract_strided_slice %5 {offsets = [0, 6], sizes = [8, 1], strides = [1, 1]} : vector<8x16xf32> to vector<8x1xf32>
    %c0_16 = arith.constant 0 : index
    %c6 = arith.constant 6 : index
    %c0_17 = arith.constant 0 : index
    %46 = vector.load %arg1[%c0_16, %c6, %c0_17] : memref<8x16x8xf32, #tpu.memory_space<vmem>>, vector<8x1x8xf32>
    %47 = vector.shape_cast %46 : vector<8x1x8xf32> to vector<8x8xf32>
    %48 = vector.broadcast %45 : vector<8x1xf32> to vector<8x8xf32>
    %49 = arith.mulf %48, %47 : vector<8x8xf32>
    %50 = arith.addf %44, %49 : vector<8x8xf32>
    %51 = vector.extract_strided_slice %5 {offsets = [0, 7], sizes = [8, 1], strides = [1, 1]} : vector<8x16xf32> to vector<8x1xf32>
    %c0_18 = arith.constant 0 : index
    %c7 = arith.constant 7 : index
    %c0_19 = arith.constant 0 : index
    %52 = vector.load %arg1[%c0_18, %c7, %c0_19] : memref<8x16x8xf32, #tpu.memory_space<vmem>>, vector<8x1x8xf32>
    %53 = vector.shape_cast %52 : vector<8x1x8xf32> to vector<8x8xf32>
    %54 = vector.broadcast %51 : vector<8x1xf32> to vector<8x8xf32>
    %55 = arith.mulf %54, %53 : vector<8x8xf32>
    %56 = arith.addf %50, %55 : vector<8x8xf32>
    %57 = vector.extract_strided_slice %5 {offsets = [0, 8], sizes = [8, 1], strides = [1, 1]} : vector<8x16xf32> to vector<8x1xf32>
    %c0_20 = arith.constant 0 : index
    %c8 = arith.constant 8 : index
    %c0_21 = arith.constant 0 : index
    %58 = vector.load %arg1[%c0_20, %c8, %c0_21] : memref<8x16x8xf32, #tpu.memory_space<vmem>>, vector<8x1x8xf32>
    %59 = vector.shape_cast %58 : vector<8x1x8xf32> to vector<8x8xf32>
    %60 = vector.broadcast %57 : vector<8x1xf32> to vector<8x8xf32>
    %61 = arith.mulf %60, %59 : vector<8x8xf32>
    %62 = arith.addf %56, %61 : vector<8x8xf32>
    %63 = vector.extract_strided_slice %5 {offsets = [0, 9], sizes = [8, 1], strides = [1, 1]} : vector<8x16xf32> to vector<8x1xf32>
    %c0_22 = arith.constant 0 : index
    %c9 = arith.constant 9 : index
    %c0_23 = arith.constant 0 : index
    %64 = vector.load %arg1[%c0_22, %c9, %c0_23] : memref<8x16x8xf32, #tpu.memory_space<vmem>>, vector<8x1x8xf32>
    %65 = vector.shape_cast %64 : vector<8x1x8xf32> to vector<8x8xf32>
    %66 = vector.broadcast %63 : vector<8x1xf32> to vector<8x8xf32>
    %67 = arith.mulf %66, %65 : vector<8x8xf32>
    %68 = arith.addf %62, %67 : vector<8x8xf32>
    %69 = vector.extract_strided_slice %5 {offsets = [0, 10], sizes = [8, 1], strides = [1, 1]} : vector<8x16xf32> to vector<8x1xf32>
    %c0_24 = arith.constant 0 : index
    %c10 = arith.constant 10 : index
    %c0_25 = arith.constant 0 : index
    %70 = vector.load %arg1[%c0_24, %c10, %c0_25] : memref<8x16x8xf32, #tpu.memory_space<vmem>>, vector<8x1x8xf32>
    %71 = vector.shape_cast %70 : vector<8x1x8xf32> to vector<8x8xf32>
    %72 = vector.broadcast %69 : vector<8x1xf32> to vector<8x8xf32>
    %73 = arith.mulf %72, %71 : vector<8x8xf32>
    %74 = arith.addf %68, %73 : vector<8x8xf32>
    %75 = vector.extract_strided_slice %5 {offsets = [0, 11], sizes = [8, 1], strides = [1, 1]} : vector<8x16xf32> to vector<8x1xf32>
    %c0_26 = arith.constant 0 : index
    %c11 = arith.constant 11 : index
    %c0_27 = arith.constant 0 : index
    %76 = vector.load %arg1[%c0_26, %c11, %c0_27] : memref<8x16x8xf32, #tpu.memory_space<vmem>>, vector<8x1x8xf32>
    %77 = vector.shape_cast %76 : vector<8x1x8xf32> to vector<8x8xf32>
    %78 = vector.broadcast %75 : vector<8x1xf32> to vector<8x8xf32>
    %79 = arith.mulf %78, %77 : vector<8x8xf32>
    %80 = arith.addf %74, %79 : vector<8x8xf32>
    %81 = vector.extract_strided_slice %5 {offsets = [0, 12], sizes = [8, 1], strides = [1, 1]} : vector<8x16xf32> to vector<8x1xf32>
    %c0_28 = arith.constant 0 : index
    %c12 = arith.constant 12 : index
    %c0_29 = arith.constant 0 : index
    %82 = vector.load %arg1[%c0_28, %c12, %c0_29] : memref<8x16x8xf32, #tpu.memory_space<vmem>>, vector<8x1x8xf32>
    %83 = vector.shape_cast %82 : vector<8x1x8xf32> to vector<8x8xf32>
    %84 = vector.broadcast %81 : vector<8x1xf32> to vector<8x8xf32>
    %85 = arith.mulf %84, %83 : vector<8x8xf32>
    %86 = arith.addf %80, %85 : vector<8x8xf32>
    %87 = vector.extract_strided_slice %5 {offsets = [0, 13], sizes = [8, 1], strides = [1, 1]} : vector<8x16xf32> to vector<8x1xf32>
    %c0_30 = arith.constant 0 : index
    %c13 = arith.constant 13 : index
    %c0_31 = arith.constant 0 : index
    %88 = vector.load %arg1[%c0_30, %c13, %c0_31] : memref<8x16x8xf32, #tpu.memory_space<vmem>>, vector<8x1x8xf32>
    %89 = vector.shape_cast %88 : vector<8x1x8xf32> to vector<8x8xf32>
    %90 = vector.broadcast %87 : vector<8x1xf32> to vector<8x8xf32>
    %91 = arith.mulf %90, %89 : vector<8x8xf32>
    %92 = arith.addf %86, %91 : vector<8x8xf32>
    %93 = vector.extract_strided_slice %5 {offsets = [0, 14], sizes = [8, 1], strides = [1, 1]} : vector<8x16xf32> to vector<8x1xf32>
    %c0_32 = arith.constant 0 : index
    %c14 = arith.constant 14 : index
    %c0_33 = arith.constant 0 : index
    %94 = vector.load %arg1[%c0_32, %c14, %c0_33] : memref<8x16x8xf32, #tpu.memory_space<vmem>>, vector<8x1x8xf32>
    %95 = vector.shape_cast %94 : vector<8x1x8xf32> to vector<8x8xf32>
    %96 = vector.broadcast %93 : vector<8x1xf32> to vector<8x8xf32>
    %97 = arith.mulf %96, %95 : vector<8x8xf32>
    %98 = arith.addf %92, %97 : vector<8x8xf32>
    %99 = vector.extract_strided_slice %5 {offsets = [0, 15], sizes = [8, 1], strides = [1, 1]} : vector<8x16xf32> to vector<8x1xf32>
    %c0_34 = arith.constant 0 : index
    %c15 = arith.constant 15 : index
    %c0_35 = arith.constant 0 : index
    %100 = vector.load %arg1[%c0_34, %c15, %c0_35] : memref<8x16x8xf32, #tpu.memory_space<vmem>>, vector<8x1x8xf32>
    %101 = vector.shape_cast %100 : vector<8x1x8xf32> to vector<8x8xf32>
    %102 = vector.broadcast %99 : vector<8x1xf32> to vector<8x8xf32>
    %103 = arith.mulf %102, %101 : vector<8x8xf32>
    %104 = arith.addf %98, %103 : vector<8x8xf32>
    %105 = tpu.reciprocal %7 : vector<8x1xf32> -> vector<8x1xf32>
    %106 = vector.broadcast %105 : vector<8x1xf32> to vector<8x8xf32>
    %107 = arith.mulf %104, %106 : vector<8x8xf32>
    %c0_36 = arith.constant 0 : index
    %c0_37 = arith.constant 0 : index
    %108 = vector.load %arg2[%c0_36, %c0_37] : memref<8x8xf32, #tpu.memory_space<vmem>>, vector<8x8xf32>
    tpu.vector_store %arg2[%c0_36, %c0_37], %107 {strides = array<i32>} : memref<8x8xf32, #tpu.memory_space<vmem>>, vector<8x8xf32>,
    return
  }
}

</mosaic_0001>

<llo_original>
// kernel: tpu_custom_call.1
$region0: #{tpu_custom_call.1}
  #allocation0 [shape = 'u32[]', space=smem, size = 0x4, offset = 0x4, fixed_abs, tag = 'smem constant byte address 0x4 - core index']
  #allocation1 [shape = 'u32[144,128]{1,0:T(1,128)}', space=vmem, size = 0x12000, scoped, tag = 'internal scratch']
  %s0 = inlined_call_operand.vmem [shape: f32[8,16], index: 0, kind: input, shape index: {}]
  %s1 = inlined_call_operand.vmem [shape: f32[8,16,8], index: 1, kind: input, shape index: {}]
  %s2 = inlined_call_operand.hbm [shape: f32[8,8], index: 2, kind: output, shape index: {}]
  %s3 = sld [smem:[#allocation0]]
  $region18: #{tpu_custom_call.1} parent=0
    _
  %s5 = ssub.s32 1, %s3
  %s6 = scalar_select 0, %s5, %s3
  $region1: #{tpu_custom_call.1} parent=0
    #allocation2 [shape = 'u8[4096]{0}', space=vmem, size = 0x1000, scoped, tag = 'output window, operand 0, single buffered']
    #allocation3 [shape = 's32[1]{0}', space=sflag, size = 0x4, scoped, tag = 'scoped memory for tpu_custom_call.1']
    %7 = vsyncpa [#allocation3], 0
    // Predicated region
    $region2: #{tpu_custom_call.1} parent=1 // pred_check
      _
    $region3: #{tpu_custom_call.1} parent=1 // pred_check_branch
      %9 = sbr.rel (0) target = $region5
    $region4: #{tpu_custom_call.1} parent=1 // pred_region
      _
    $region5: #{tpu_custom_call.1} parent=1 // pred_fallthru
      _
    // Predicated region
    $region6: #{tpu_custom_call.1} parent=1 // pred_check
      _
    $region7: #{tpu_custom_call.1} parent=1 // pred_check_branch
      %11 = sbr.rel (0) target = $region9
    $region8: #{tpu_custom_call.1} parent=1 // pred_region
      _
    $region9: #{tpu_custom_call.1} parent=1 // pred_fallthru
      _
    %v12 = vld [vmem:[%s0] sm:$0xff]
    %vm13 = vcmask 130048
    %v14 = vsel %vm13, %v12, -inf
    %15 = vmax.xlane.f32.xlu0 %v14
    %v16 = vpop.xlane.xlu0 %15
    %v17 = vsub.f32 %v12, %v16
    %v18 = vmul.f32 %v17, 1.442695
    %v19 = vpow.pop %v18
    %v20 = vsel %vm13, %v19, 0.0
    %21 = vadd.xlane.f32.xlu0 %v20
    %v22 = vpop.xlane.xlu0 %21
    %v23 = vld [vmem:[%s1] sm:$0x1]
    %v24 = vld [vmem:[%s1 + $0x10] sm:$0x1]
    %v25 = vld [vmem:[%s1 + $0x20] sm:$0x1]
    %v26 = vld [vmem:[%s1 + $0x30] sm:$0x1]
    %v27 = vld [vmem:[%s1 + $0x40] sm:$0x1]
    %v28 = vld [vmem:[%s1 + $0x50] sm:$0x1]
    %v29 = vld [vmem:[%s1 + $0x60] sm:$0x1]
    %v30 = vld [vmem:[%s1 + $0x70] sm:$0x1]
    %32 = vset.pattern.permute.xlu0 0
    %33 = vperm.xlu0 %32, %v19
    %v34 = vpop.permute.xlu0 %33
    %v44 = vrot.slane %v24, 7
    %vm45 = vcmask 1041409
    %v46 = vsel %vm45, %v44, %v23
    %v47 = vrot.slane %v25, 6
    %vm48 = vcmask 1042434
    %v49 = vsel %vm48, %v47, %v46
    %v50 = vrot.slane %v26, 5
    %vm51 = vcmask 1043459
    %v52 = vsel %vm51, %v50, %v49
    %v53 = vrot.slane %v27, 4
    %vm54 = vcmask 1044484
    %v55 = vsel %vm54, %v53, %v52
    %v56 = vrot.slane %v28, 3
    %vm57 = vcmask 1045509
    %v58 = vsel %vm57, %v56, %v55
    %v59 = vrot.slane %v29, 2
    %vm60 = vcmask 1046534
    %v61 = vsel %vm60, %v59, %v58
    %v62 = vrot.slane %v30, 1
    %vm63 = vcmask 1047559
    %v64 = vsel %vm63, %v62, %v61
    %v66 = vmul.f32 %v34, %v64
    %v67 = vadd.f32 %v66, 0.0
    %v68 = vld [vmem:[%s1 + $0x1] sm:$0x1]
    %v69 = vld [vmem:[%s1 + $0x11] sm:$0x1]
    %v70 = vld [vmem:[%s1 + $0x21] sm:$0x1]
    %v71 = vld [vmem:[%s1 + $0x31] sm:$0x1]
    %v72 = vld [vmem:[%s1 + $0x41] sm:$0x1]
    %v73 = vld [vmem:[%s1 + $0x51] sm:$0x1]
    %v74 = vld [vmem:[%s1 + $0x61] sm:$0x1]
    %v75 = vld [vmem:[%s1 + $0x71] sm:$0x1]
    %76 = vset.pattern.permute.xlu0 1
    %77 = vperm.xlu0 %76, %v19
    %v78 = vpop.permute.xlu0 %77
    %v88 = vrot.slane %v69, 7
    %v89 = vsel %vm45, %v88, %v68
    %v90 = vrot.slane %v70, 6
    %v91 = vsel %vm48, %v90, %v89
    %v92 = vrot.slane %v71, 5
    %v93 = vsel %vm51, %v92, %v91
    %v94 = vrot.slane %v72, 4
    %v95 = vsel %vm54, %v94, %v93
    %v96 = vrot.slane %v73, 3
    %v97 = vsel %vm57, %v96, %v95
    %v98 = vrot.slane %v74, 2
    %v99 = vsel %vm60, %v98, %v97
    %v100 = vrot.slane %v75, 1
    %v101 = vsel %vm63, %v100, %v99
    %v103 = vmul.f32 %v78, %v101
    %v104 = vadd.f32 %v67, %v103
    %v105 = vld [vmem:[%s1 + $0x2] sm:$0x1]
    %v106 = vld [vmem:[%s1 + $0x12] sm:$0x1]
    %v107 = vld [vmem:[%s1 + $0x22] sm:$0x1]
    %v108 = vld [vmem:[%s1 + $0x32] sm:$0x1]
    %v109 = vld [vmem:[%s1 + $0x42] sm:$0x1]
    %v110 = vld [vmem:[%s1 + $0x52] sm:$0x1]
    %v111 = vld [vmem:[%s1 + $0x62] sm:$0x1]
    %v112 = vld [vmem:[%s1 + $0x72] sm:$0x1]
    %113 = vset.pattern.permute.xlu0 2
    %114 = vperm.xlu0 %113, %v19
    %v115 = vpop.permute.xlu0 %114
    %v125 = vrot.slane %v106, 7
    %v126 = vsel %vm45, %v125, %v105
    %v127 = vrot.slane %v107, 6
    %v128 = vsel %vm48, %v127, %v126
    %v129 = vrot.slane %v108, 5
    %v130 = vsel %vm51, %v129, %v128
    %v131 = vrot.slane %v109, 4
    %v132 = vsel %vm54, %v131, %v130
    %v133 = vrot.slane %v110, 3
    %v134 = vsel %vm57, %v133, %v132
    %v135 = vrot.slane %v111, 2
    %v136 = vsel %vm60, %v135, %v134
    %v137 = vrot.slane %v112, 1
    %v138 = vsel %vm63, %v137, %v136
    %v140 = vmul.f32 %v115, %v138
    %v141 = vadd.f32 %v104, %v140
    %v142 = vld [vmem:[%s1 + $0x3] sm:$0x1]
    %v143 = vld [vmem:[%s1 + $0x13] sm:$0x1]
    %v144 = vld [vmem:[%s1 + $0x23] sm:$0x1]
    %v145 = vld [vmem:[%s1 + $0x33] sm:$0x1]
    %v146 = vld [vmem:[%s1 + $0x43] sm:$0x1]
    %v147 = vld [vmem:[%s1 + $0x53] sm:$0x1]
    %v148 = vld [vmem:[%s1 + $0x63] sm:$0x1]
    %v149 = vld [vmem:[%s1 + $0x73] sm:$0x1]
    %150 = vset.pattern.permute.xlu0 3
    %151 = vperm.xlu0 %150, %v19
    %v152 = vpop.permute.xlu0 %151
    %v162 = vrot.slane %v143, 7
    %v163 = vsel %vm45, %v162, %v142
    %v164 = vrot.slane %v144, 6
    %v165 = vsel %vm48, %v164, %v163
    %v166 = vrot.slane %v145, 5
    %v167 = vsel %vm51, %v166, %v165
    %v168 = vrot.slane %v146, 4
    %v169 = vsel %vm54, %v168, %v167
    %v170 = vrot.slane %v147, 3
    %v171 = vsel %vm57, %v170, %v169
    %v172 = vrot.slane %v148, 2
    %v173 = vsel %vm60, %v172, %v171
    %v174 = vrot.slane %v149, 1
    %v175 = vsel %vm63, %v174, %v173
    %v177 = vmul.f32 %v152, %v175
    %v178 = vadd.f32 %v141, %v177
    %v179 = vld [vmem:[%s1 + $0x4] sm:$0x1]
    %v180 = vld [vmem:[%s1 + $0x14] sm:$0x1]
    %v181 = vld [vmem:[%s1 + $0x24] sm:$0x1]
    %v182 = vld [vmem:[%s1 + $0x34] sm:$0x1]
    %v183 = vld [vmem:[%s1 + $0x44] sm:$0x1]
    %v184 = vld [vmem:[%s1 + $0x54] sm:$0x1]
    %v185 = vld [vmem:[%s1 + $0x64] sm:$0x1]
    %v186 = vld [vmem:[%s1 + $0x74] sm:$0x1]
    %187 = vset.pattern.permute.xlu0 4
    %188 = vperm.xlu0 %187, %v19
    %v189 = vpop.permute.xlu0 %188
    %v199 = vrot.slane %v180, 7
    %v200 = vsel %vm45, %v199, %v179
    %v201 = vrot.slane %v181, 6
    %v202 = vsel %vm48, %v201, %v200
    %v203 = vrot.slane %v182, 5
    %v204 = vsel %vm51, %v203, %v202
    %v205 = vrot.slane %v183, 4
    %v206 = vsel %vm54, %v205, %v204
    %v207 = vrot.slane %v184, 3
    %v208 = vsel %vm57, %v207, %v206
    %v209 = vrot.slane %v185, 2
    %v210 = vsel %vm60, %v209, %v208
    %v211 = vrot.slane %v186, 1
    %v212 = vsel %vm63, %v211, %v210
    %v214 = vmul.f32 %v189, %v212
    %v215 = vadd.f32 %v178, %v214
    %v216 = vld [vmem:[%s1 + $0x5] sm:$0x1]
    %v217 = vld [vmem:[%s1 + $0x15] sm:$0x1]
    %v218 = vld [vmem:[%s1 + $0x25] sm:$0x1]
    %v219 = vld [vmem:[%s1 + $0x35] sm:$0x1]
    %v220 = vld [vmem:[%s1 + $0x45] sm:$0x1]
    %v221 = vld [vmem:[%s1 + $0x55] sm:$0x1]
    %v222 = vld [vmem:[%s1 + $0x65] sm:$0x1]
    %v223 = vld [vmem:[%s1 + $0x75] sm:$0x1]
    %224 = vset.pattern.permute.xlu0 5
    %225 = vperm.xlu0 %224, %v19
    %v226 = vpop.permute.xlu0 %225
    %v236 = vrot.slane %v217, 7
    %v237 = vsel %vm45, %v236, %v216
    %v238 = vrot.slane %v218, 6
    %v239 = vsel %vm48, %v238, %v237
    %v240 = vrot.slane %v219, 5
    %v241 = vsel %vm51, %v240, %v239
    %v242 = vrot.slane %v220, 4
    %v243 = vsel %vm54, %v242, %v241
    %v244 = vrot.slane %v221, 3
    %v245 = vsel %vm57, %v244, %v243
    %v246 = vrot.slane %v222, 2
    %v247 = vsel %vm60, %v246, %v245
    %v248 = vrot.slane %v223, 1
    %v249 = vsel %vm63, %v248, %v247
    %v251 = vmul.f32 %v226, %v249
    %v252 = vadd.f32 %v215, %v251
    %v253 = vld [vmem:[%s1 + $0x6] sm:$0x1]
    %v254 = vld [vmem:[%s1 + $0x16] sm:$0x1]
    %v255 = vld [vmem:[%s1 + $0x26] sm:$0x1]
    %v256 = vld [vmem:[%s1 + $0x36] sm:$0x1]
    %v257 = vld [vmem:[%s1 + $0x46] sm:$0x1]
    %v258 = vld [vmem:[%s1 + $0x56] sm:$0x1]
    %v259 = vld [vmem:[%s1 + $0x66] sm:$0x1]
    %v260 = vld [vmem:[%s1 + $0x76] sm:$0x1]
    %261 = vset.pattern.permute.xlu0 6
    %262 = vperm.xlu0 %261, %v19
    %v263 = vpop.permute.xlu0 %262
    %v273 = vrot.slane %v254, 7
    %v274 = vsel %vm45, %v273, %v253
    %v275 = vrot.slane %v255, 6
    %v276 = vsel %vm48, %v275, %v274
    %v277 = vrot.slane %v256, 5
    %v278 = vsel %vm51, %v277, %v276
    %v279 = vrot.slane %v257, 4
    %v280 = vsel %vm54, %v279, %v278
    %v281 = vrot.slane %v258, 3
    %v282 = vsel %vm57, %v281, %v280
    %v283 = vrot.slane %v259, 2
    %v284 = vsel %vm60, %v283, %v282
    %v285 = vrot.slane %v260, 1
    %v286 = vsel %vm63, %v285, %v284
    %v288 = vmul.f32 %v263, %v286
    %v289 = vadd.f32 %v252, %v288
    %v290 = vld [vmem:[%s1 + $0x7] sm:$0x1]
    %v291 = vld [vmem:[%s1 + $0x17] sm:$0x1]
    %v292 = vld [vmem:[%s1 + $0x27] sm:$0x1]
    %v293 = vld [vmem:[%s1 + $0x37] sm:$0x1]
    %v294 = vld [vmem:[%s1 + $0x47] sm:$0x1]
    %v295 = vld [vmem:[%s1 + $0x57] sm:$0x1]
    %v296 = vld [vmem:[%s1 + $0x67] sm:$0x1]
    %v297 = vld [vmem:[%s1 + $0x77] sm:$0x1]
    %298 = vset.pattern.permute.xlu0 7
    %299 = vperm.xlu0 %298, %v19
    %v300 = vpop.permute.xlu0 %299
    %v310 = vrot.slane %v291, 7
    %v311 = vsel %vm45, %v310, %v290
    %v312 = vrot.slane %v292, 6
    %v313 = vsel %vm48, %v312, %v311
    %v314 = vrot.slane %v293, 5
    %v315 = vsel %vm51, %v314, %v313
    %v316 = vrot.slane %v294, 4
    %v317 = vsel %vm54, %v316, %v315
    %v318 = vrot.slane %v295, 3
    %v319 = vsel %vm57, %v318, %v317
    %v320 = vrot.slane %v296, 2
    %v321 = vsel %vm60, %v320, %v319
    %v322 = vrot.slane %v297, 1
    %v323 = vsel %vm63, %v322, %v321
    %v325 = vmul.f32 %v300, %v323
    %v326 = vadd.f32 %v289, %v325
    %v327 = vld [vmem:[%s1 + $0x8] sm:$0x1]
    %v328 = vld [vmem:[%s1 + $0x18] sm:$0x1]
    %v329 = vld [vmem:[%s1 + $0x28] sm:$0x1]
    %v330 = vld [vmem:[%s1 + $0x38] sm:$0x1]
    %v331 = vld [vmem:[%s1 + $0x48] sm:$0x1]
    %v332 = vld [vmem:[%s1 + $0x58] sm:$0x1]
    %v333 = vld [vmem:[%s1 + $0x68] sm:$0x1]
    %v334 = vld [vmem:[%s1 + $0x78] sm:$0x1]
    %335 = vset.pattern.permute.xlu0 8
    %336 = vperm.xlu0 %335, %v19
    %v337 = vpop.permute.xlu0 %336
    %v347 = vrot.slane %v328, 7
    %v348 = vsel %vm45, %v347, %v327
    %v349 = vrot.slane %v329, 6
    %v350 = vsel %vm48, %v349, %v348
    %v351 = vrot.slane %v330, 5
    %v352 = vsel %vm51, %v351, %v350
    %v353 = vrot.slane %v331, 4
    %v354 = vsel %vm54, %v353, %v352
    %v355 = vrot.slane %v332, 3
    %v356 = vsel %vm57, %v355, %v354
    %v357 = vrot.slane %v333, 2
    %v358 = vsel %vm60, %v357, %v356
    %v359 = vrot.slane %v334, 1
    %v360 = vsel %vm63, %v359, %v358
    %v362 = vmul.f32 %v337, %v360
    %v363 = vadd.f32 %v326, %v362
    %v364 = vld [vmem:[%s1 + $0x9] sm:$0x1]
    %v365 = vld [vmem:[%s1 + $0x19] sm:$0x1]
    %v366 = vld [vmem:[%s1 + $0x29] sm:$0x1]
    %v367 = vld [vmem:[%s1 + $0x39] sm:$0x1]
    %v368 = vld [vmem:[%s1 + $0x49] sm:$0x1]
    %v369 = vld [vmem:[%s1 + $0x59] sm:$0x1]
    %v370 = vld [vmem:[%s1 + $0x69] sm:$0x1]
    %v371 = vld [vmem:[%s1 + $0x79] sm:$0x1]
    %372 = vset.pattern.permute.xlu0 9
    %373 = vperm.xlu0 %372, %v19
    %v374 = vpop.permute.xlu0 %373
    %v384 = vrot.slane %v365, 7
    %v385 = vsel %vm45, %v384, %v364
    %v386 = vrot.slane %v366, 6
    %v387 = vsel %vm48, %v386, %v385
    %v388 = vrot.slane %v367, 5
    %v389 = vsel %vm51, %v388, %v387
    %v390 = vrot.slane %v368, 4
    %v391 = vsel %vm54, %v390, %v389
    %v392 = vrot.slane %v369, 3
    %v393 = vsel %vm57, %v392, %v391
    %v394 = vrot.slane %v370, 2
    %v395 = vsel %vm60, %v394, %v393
    %v396 = vrot.slane %v371, 1
    %v397 = vsel %vm63, %v396, %v395
    %v399 = vmul.f32 %v374, %v397
    %v400 = vadd.f32 %v363, %v399
    %v401 = vld [vmem:[%s1 + $0xa] sm:$0x1]
    %v402 = vld [vmem:[%s1 + $0x1a] sm:$0x1]
    %v403 = vld [vmem:[%s1 + $0x2a] sm:$0x1]
    %v404 = vld [vmem:[%s1 + $0x3a] sm:$0x1]
    %v405 = vld [vmem:[%s1 + $0x4a] sm:$0x1]
    %v406 = vld [vmem:[%s1 + $0x5a] sm:$0x1]
    %v407 = vld [vmem:[%s1 + $0x6a] sm:$0x1]
    %v408 = vld [vmem:[%s1 + $0x7a] sm:$0x1]
    %409 = vset.pattern.permute.xlu0 10
    %410 = vperm.xlu0 %409, %v19
    %v411 = vpop.permute.xlu0 %410
    %v421 = vrot.slane %v402, 7
    %v422 = vsel %vm45, %v421, %v401
    %v423 = vrot.slane %v403, 6
    %v424 = vsel %vm48, %v423, %v422
    %v425 = vrot.slane %v404, 5
    %v426 = vsel %vm51, %v425, %v424
    %v427 = vrot.slane %v405, 4
    %v428 = vsel %vm54, %v427, %v426
    %v429 = vrot.slane %v406, 3
    %v430 = vsel %vm57, %v429, %v428
    %v431 = vrot.slane %v407, 2
    %v432 = vsel %vm60, %v431, %v430
    %v433 = vrot.slane %v408, 1
    %v434 = vsel %vm63, %v433, %v432
    %v436 = vmul.f32 %v411, %v434
    %v437 = vadd.f32 %v400, %v436
    %v438 = vld [vmem:[%s1 + $0xb] sm:$0x1]
    %v439 = vld [vmem:[%s1 + $0x1b] sm:$0x1]
    %v440 = vld [vmem:[%s1 + $0x2b] sm:$0x1]
    %v441 = vld [vmem:[%s1 + $0x3b] sm:$0x1]
    %v442 = vld [vmem:[%s1 + $0x4b] sm:$0x1]
    %v443 = vld [vmem:[%s1 + $0x5b] sm:$0x1]
    %v444 = vld [vmem:[%s1 + $0x6b] sm:$0x1]
    %v445 = vld [vmem:[%s1 + $0x7b] sm:$0x1]
    %446 = vset.pattern.permute.xlu0 11
    %447 = vperm.xlu0 %446, %v19
    %v448 = vpop.permute.xlu0 %447
    %v458 = vrot.slane %v439, 7
    %v459 = vsel %vm45, %v458, %v438
    %v460 = vrot.slane %v440, 6
    %v461 = vsel %vm48, %v460, %v459
    %v462 = vrot.slane %v441, 5
    %v463 = vsel %vm51, %v462, %v461
    %v464 = vrot.slane %v442, 4
    %v465 = vsel %vm54, %v464, %v463
    %v466 = vrot.slane %v443, 3
    %v467 = vsel %vm57, %v466, %v465
    %v468 = vrot.slane %v444, 2
    %v469 = vsel %vm60, %v468, %v467
    %v470 = vrot.slane %v445, 1
    %v471 = vsel %vm63, %v470, %v469
    %v473 = vmul.f32 %v448, %v471
    %v474 = vadd.f32 %v437, %v473
    %v475 = vld [vmem:[%s1 + $0xc] sm:$0x1]
    %v476 = vld [vmem:[%s1 + $0x1c] sm:$0x1]
    %v477 = vld [vmem:[%s1 + $0x2c] sm:$0x1]
    %v478 = vld [vmem:[%s1 + $0x3c] sm:$0x1]
    %v479 = vld [vmem:[%s1 + $0x4c] sm:$0x1]
    %v480 = vld [vmem:[%s1 + $0x5c] sm:$0x1]
    %v481 = vld [vmem:[%s1 + $0x6c] sm:$0x1]
    %v482 = vld [vmem:[%s1 + $0x7c] sm:$0x1]
    %483 = vset.pattern.permute.xlu0 12
    %484 = vperm.xlu0 %483, %v19
    %v485 = vpop.permute.xlu0 %484
    %v495 = vrot.slane %v476, 7
    %v496 = vsel %vm45, %v495, %v475
    %v497 = vrot.slane %v477, 6
    %v498 = vsel %vm48, %v497, %v496
    %v499 = vrot.slane %v478, 5
    %v500 = vsel %vm51, %v499, %v498
    %v501 = vrot.slane %v479, 4
    %v502 = vsel %vm54, %v501, %v500
    %v503 = vrot.slane %v480, 3
    %v504 = vsel %vm57, %v503, %v502
    %v505 = vrot.slane %v481, 2
    %v506 = vsel %vm60, %v505, %v504
    %v507 = vrot.slane %v482, 1
    %v508 = vsel %vm63, %v507, %v506
    %v510 = vmul.f32 %v485, %v508
    %v511 = vadd.f32 %v474, %v510
    %v512 = vld [vmem:[%s1 + $0xd] sm:$0x1]
    %v513 = vld [vmem:[%s1 + $0x1d] sm:$0x1]
    %v514 = vld [vmem:[%s1 + $0x2d] sm:$0x1]
    %v515 = vld [vmem:[%s1 + $0x3d] sm:$0x1]
    %v516 = vld [vmem:[%s1 + $0x4d] sm:$0x1]
    %v517 = vld [vmem:[%s1 + $0x5d] sm:$0x1]
    %v518 = vld [vmem:[%s1 + $0x6d] sm:$0x1]
    %v519 = vld [vmem:[%s1 + $0x7d] sm:$0x1]
    %520 = vset.pattern.permute.xlu0 13
    %521 = vperm.xlu0 %520, %v19
    %v522 = vpop.permute.xlu0 %521
    %v532 = vrot.slane %v513, 7
    %v533 = vsel %vm45, %v532, %v512
    %v534 = vrot.slane %v514, 6
    %v535 = vsel %vm48, %v534, %v533
    %v536 = vrot.slane %v515, 5
    %v537 = vsel %vm51, %v536, %v535
    %v538 = vrot.slane %v516, 4
    %v539 = vsel %vm54, %v538, %v537
    %v540 = vrot.slane %v517, 3
    %v541 = vsel %vm57, %v540, %v539
    %v542 = vrot.slane %v518, 2
    %v543 = vsel %vm60, %v542, %v541
    %v544 = vrot.slane %v519, 1
    %v545 = vsel %vm63, %v544, %v543
    %v547 = vmul.f32 %v522, %v545
    %v548 = vadd.f32 %v511, %v547
    %v549 = vld [vmem:[%s1 + $0xe] sm:$0x1]
    %v550 = vld [vmem:[%s1 + $0x1e] sm:$0x1]
    %v551 = vld [vmem:[%s1 + $0x2e] sm:$0x1]
    %v552 = vld [vmem:[%s1 + $0x3e] sm:$0x1]
    %v553 = vld [vmem:[%s1 + $0x4e] sm:$0x1]
    %v554 = vld [vmem:[%s1 + $0x5e] sm:$0x1]
    %v555 = vld [vmem:[%s1 + $0x6e] sm:$0x1]
    %v556 = vld [vmem:[%s1 + $0x7e] sm:$0x1]
    %557 = vset.pattern.permute.xlu0 14
    %558 = vperm.xlu0 %557, %v19
    %v559 = vpop.permute.xlu0 %558
    %v569 = vrot.slane %v550, 7
    %v570 = vsel %vm45, %v569, %v549
    %v571 = vrot.slane %v551, 6
    %v572 = vsel %vm48, %v571, %v570
    %v573 = vrot.slane %v552, 5
    %v574 = vsel %vm51, %v573, %v572
    %v575 = vrot.slane %v553, 4
    %v576 = vsel %vm54, %v575, %v574
    %v577 = vrot.slane %v554, 3
    %v578 = vsel %vm57, %v577, %v576
    %v579 = vrot.slane %v555, 2
    %v580 = vsel %vm60, %v579, %v578
    %v581 = vrot.slane %v556, 1
    %v582 = vsel %vm63, %v581, %v580
    %v584 = vmul.f32 %v559, %v582
    %v585 = vadd.f32 %v548, %v584
    %v586 = vld [vmem:[%s1 + $0xf] sm:$0x1]
    %v587 = vld [vmem:[%s1 + $0x1f] sm:$0x1]
    %v588 = vld [vmem:[%s1 + $0x2f] sm:$0x1]
    %v589 = vld [vmem:[%s1 + $0x3f] sm:$0x1]
    %v590 = vld [vmem:[%s1 + $0x4f] sm:$0x1]
    %v591 = vld [vmem:[%s1 + $0x5f] sm:$0x1]
    %v592 = vld [vmem:[%s1 + $0x6f] sm:$0x1]
    %v593 = vld [vmem:[%s1 + $0x7f] sm:$0x1]
    %594 = vset.pattern.permute.xlu0 15
    %595 = vperm.xlu0 %594, %v19
    %v596 = vpop.permute.xlu0 %595
    %v606 = vrot.slane %v587, 7
    %v607 = vsel %vm45, %v606, %v586
    %v608 = vrot.slane %v588, 6
    %v609 = vsel %vm48, %v608, %v607
    %v610 = vrot.slane %v589, 5
    %v611 = vsel %vm51, %v610, %v609
    %v612 = vrot.slane %v590, 4
    %v613 = vsel %vm54, %v612, %v611
    %v614 = vrot.slane %v591, 3
    %v615 = vsel %vm57, %v614, %v613
    %v616 = vrot.slane %v592, 2
    %v617 = vsel %vm60, %v616, %v615
    %v618 = vrot.slane %v593, 1
    %v619 = vsel %vm63, %v618, %v617
    %v621 = vmul.f32 %v596, %v619
    %v622 = vadd.f32 %v585, %v621
    %v623 = vrcp.pop %v22
    %v624 = vmul.f32 %v622, %v623
    %vm625 = vcmask 64512
    %626 = vst.msk [vmem:[#allocation2] sm:$0xff] %vm625, %v624
    // Predicated region
    $region10: #{tpu_custom_call.1} parent=1 // pred_check
      _
    $region11: #{tpu_custom_call.1} parent=1 // pred_check_branch
      %628 = sbr.rel (0) target = $region13
    $region12: #{tpu_custom_call.1} parent=1 // pred_region
      %s630 = ssub.s32 128, 128
      %631 = vsyncadd [#allocation3], %s630
      %s633 = sshll.u32 [#allocation2], 4
      %s634 = int_to_ptr.vmem [resolvable:$true] %s633
      %636 = dma.vmem_to_hbm [thread:$0]  %s634, 128, %s2, [#allocation3]
    $region13: #{tpu_custom_call.1} parent=1 // pred_fallthru
      _
    // Predicated region
    $region14: #{tpu_custom_call.1} parent=1 // pred_check
      _
    $region15: #{tpu_custom_call.1} parent=1 // pred_check_branch
      %638 = sbr.rel (0) target = $region17
    $region16: #{tpu_custom_call.1} parent=1 // pred_region
      %639 = dma.done [#allocation3], 128
    $region17: #{tpu_custom_call.1} parent=1 // pred_fallthru
      _
    %640 = vsyncpa [#allocation3], 1

</llo_original>
